<compile_context>
chip_gen: v7x
topology: tpu7x:2x2x1
jax: 0.10.0
libtpu: 0.0.40
codegen_flags: <defaults>
</compile_context>

<pallas_src>
import functools

import numpy as np
import jax
import jax.numpy as jnp
from jax import lax
from jax.experimental import pallas as pl
from jax.experimental.pallas import tpu as pltpu

_LANE = 128


def _round_down_lane(x):
    return max(_LANE, (x // _LANE) * _LANE)


def _vmem_budget_bytes():
    """~75% of physical VMEM (v7x: 64 MiB -> 48 MiB; v5e/v6e: 128 MiB -> 96 MiB)."""
    cap = 64 << 20
    try:
        cap = int(getattr(pltpu.get_tpu_info(), "vmem_capacity_bytes", cap))
    except Exception:
        pass
    return min(cap * 3 // 4, 96 << 20)


# ----------------------------------------------------------------------------
# Kernels
# ----------------------------------------------------------------------------
def _matmul_bn_relu_kernel(x_ref, w_ref, shift_ref, o_ref, acc_ref):
    # grid = (N, co_tiles, hw_tiles, k_tiles); reduction (k) axis last, "arbitrary".
    # x_ref:     (K_blk, TS)      activations (channels on sublanes, spatial on lanes)
    # w_ref:     (CO_blk, K_blk)  conv weight with BN scale pre-folded
    # shift_ref: (CO_blk, 1)      beta - running_mean * scale
    # o_ref:     (CO_blk, TS)     lane-dense output tile
    # acc_ref:   (CO_blk, TS)     f32 accumulator scratch
    kk = pl.program_id(3)

    @pl.when(kk == 0)
    def _():
        acc_ref[...] = jnp.zeros_like(acc_ref)

    acc_ref[...] += lax.dot_general(
        w_ref[...], x_ref[...],
        dimension_numbers=(((1,), (0,)), ((), ())),
        preferred_element_type=jnp.float32)

    @pl.when(kk == pl.num_programs(3) - 1)
    def _():
        # f32 epilogue; cast only at the store (v5e has no bf16 VALU).
        o_ref[...] = jnp.maximum(acc_ref[...] + shift_ref[...], 0.0).astype(o_ref.dtype)


def _bn_relu_kernel(y_ref, shift_ref, o_ref):
    o_ref[...] = jnp.maximum(
        y_ref[...].astype(jnp.float32) + shift_ref[...], 0.0).astype(o_ref.dtype)


# ----------------------------------------------------------------------------
# Tile selection (traffic- and VMEM-aware)
# ----------------------------------------------------------------------------
def _choose_matmul_tiles(K, C_out, HW, N, in_bytes, out_bytes, vmem_budget):
    # C_out block: keep it fully resident unless large (ragged last block is fine:
    # garbage rows never reach HBM -- output stores are masked).
    co_blk = C_out if C_out <= 512 else 256
    # K (reduction) block: only split when large and cleanly divisible, because a
    # ragged reduction block would pull undefined padding into the accumulation.
    k_blk = 512 if (K > 2048 and K % 512 == 0) else K

    if HW <= _LANE:
        return co_blk, k_blk, HW  # tiny spatial extent: one full-extent block

    ts_cap = (HW // _LANE) * _LANE  # lane-multiple tile; ragged tail handled by Pallas
    # Traffic target: >= ~1.5 MiB of HBM per grid step.
    per_lane_hbm = k_blk * in_bytes + co_blk * out_bytes
    ts_traffic = (3 << 20) // (2 * max(per_lane_hbm, 1))
    # VMEM: double-buffered input + output blocks, f32 accumulator, 2x weight block.
    fixed = 2 * co_blk * k_blk * in_bytes + 2 * co_blk * 4 + (256 << 10)
    per_lane_vmem = 2 * k_blk * in_bytes + 2 * co_blk * out_bytes + co_blk * 4
    ts_vmem = max(_LANE, (vmem_budget - fixed) // per_lane_vmem)

    ts = _round_down_lane(min(max(ts_traffic, _LANE), ts_vmem, ts_cap))
    # v7x has two TensorCores: make sure the parallel grid has >= 2 steps.
    if N * pl.cdiv(C_out, co_blk) * pl.cdiv(HW, ts) < 2 and ts > _LANE:
        ts = _round_down_lane(ts // 2)
    return co_blk, k_blk, ts


def _choose_epilogue_tiles(C_out, HW, N, out_bytes, vmem_budget):
    co_blk = C_out if C_out <= 512 else 256
    if HW <= _LANE:
        return co_blk, HW
    ts_cap = (HW // _LANE) * _LANE
    per_lane_hbm = co_blk * (4 + out_bytes)
    ts_traffic = (3 << 20) // (2 * max(per_lane_hbm, 1))
    per_lane_vmem = 2 * co_blk * (4 + out_bytes)
    ts_vmem = max(_LANE, (vmem_budget - (256 << 10)) // per_lane_vmem)
    ts = _round_down_lane(min(max(ts_traffic, _LANE), ts_vmem, ts_cap))
    if N * pl.cdiv(C_out, co_blk) * pl.cdiv(HW, ts) < 2 and ts > _LANE:
        ts = _round_down_lane(ts // 2)
    return co_blk, ts


# ----------------------------------------------------------------------------
# Forward
# ----------------------------------------------------------------------------
@functools.partial(
    jax.jit,
    static_argnames=("k", "s", "p", "g", "eps", "stream_dtype", "out_dtype"))
def conv_module_forward(x, weight, gamma, beta, running_mean, running_var, *,
                        k=1, s=1, p=0, g=1, eps=1e-3,
                        stream_dtype=jnp.bfloat16, out_dtype=jnp.float32):
    """x: [N, C_in, H, W] (NCHW). weight: [C_out, C_in, k, k] (PyTorch OIHW)."""
    if g != 1:
        # TODO(synk): grouped convolution (g > 1) not implemented.
        raise NotImplementedError("groups > 1 not implemented")

    N, C_in, H, W = x.shape
    C_out = weight.shape[0]

    # Fold eval-mode BatchNorm: scale into the weight, shift stays a per-channel add.
    scale = gamma.astype(jnp.float32) / jnp.sqrt(running_var.astype(jnp.float32) + eps)
    shift = beta.astype(jnp.float32) - running_mean.astype(jnp.float32) * scale
    shift2d = shift.reshape(C_out, 1)

    in_bytes = np.dtype(stream_dtype).itemsize
    out_bytes = np.dtype(out_dtype).itemsize
    vmem_budget = _vmem_budget_bytes()

    if k == 1 and s == 1 and p == 0:
        # 1x1 conv: NCHW -> [N, C_in, H*W] is a free reshape (no transpose).
        Ho, Wo, K = H, W, C_in
        HW = H * W
        x3d = x.reshape(N, C_in, HW).astype(stream_dtype)
        w2d = (weight.reshape(C_out, C_in).astype(jnp.float32)
               * scale[:, None]).astype(stream_dtype)

        co_blk, k_blk, ts = _choose_matmul_tiles(
            K, C_out, HW, N, in_bytes, out_bytes, vmem_budget)
        grid = (N, pl.cdiv(C_out, co_blk), pl.cdiv(HW, ts), pl.cdiv(K, k_blk))

        cost = pl.CostEstimate(
            flops=2 * N * C_out * K * HW,
            transcendentals=0,
            bytes_accessed=(x3d.size * in_bytes + w2d.size * in_bytes
                            + shift2d.size * 4 + N * C_out * HW * out_bytes))

        out3d = pl.pallas_call(
            _matmul_bn_relu_kernel,
            out_shape=jax.ShapeDtypeStruct((N, C_out, HW), out_dtype),
            grid=grid,
            in_specs=[
                pl.BlockSpec((None, k_blk, ts), lambda n, co, hw, kk: (n, kk, hw)),
                pl.BlockSpec((co_blk, k_blk), lambda n, co, hw, kk: (co, kk)),
                pl.BlockSpec((co_blk, 1), lambda n, co, hw, kk: (co, 0)),
            ],
            out_specs=pl.BlockSpec((None, co_blk, ts),
                                   lambda n, co, hw, kk: (n, co, hw)),
            scratch_shapes=[pltpu.VMEM((co_blk, ts), jnp.float32)],
            compiler_params=pltpu.CompilerParams(
                dimension_semantics=("parallel", "parallel", "parallel", "arbitrary"),
                vmem_limit_bytes=int(vmem_budget)),
            cost_estimate=cost,
        )(x3d, w2d, shift2d)
        return out3d.reshape(N, C_out, Ho, Wo)

    # k > 1 (or strided / padded): do NOT materialize im2col in HBM (~k^2x traffic
    # on a bandwidth-bound op).  The conv runs through XLA; the folded-BN shift +
    # ReLU epilogue stays fused in a lane-dense Pallas kernel.
    # TODO(synk): a tap-accumulating Pallas conv (shifted-window DMA per kh,kw
    # with an "arbitrary" tap axis) is not implemented.
    Ho = (H + 2 * p - k) // s + 1
    Wo = (W + 2 * p - k) // s + 1
    HW = Ho * Wo
    w_folded = (weight.astype(jnp.float32)
                * scale[:, None, None, None]).astype(stream_dtype)
    y = lax.conv_general_dilated(
        x.astype(stream_dtype), w_folded,
        window_strides=(s, s), padding=[(p, p), (p, p)],
        dimension_numbers=("NCHW", "OIHW", "NCHW"),
        preferred_element_type=jnp.float32)
    y3d = y.reshape(N, C_out, HW)

    co_blk, ts = _choose_epilogue_tiles(C_out, HW, N, out_bytes, vmem_budget)
    grid = (N, pl.cdiv(C_out, co_blk), pl.cdiv(HW, ts))
    out3d = pl.pallas_call(
        _bn_relu_kernel,
        out_shape=jax.ShapeDtypeStruct((N, C_out, HW), out_dtype),
        grid=grid,
        in_specs=[
            pl.BlockSpec((None, co_blk, ts), lambda n, co, hw: (n, co, hw)),
            pl.BlockSpec((co_blk, 1), lambda n, co, hw: (co, 0)),
        ],
        out_specs=pl.BlockSpec((None, co_blk, ts), lambda n, co, hw: (n, co, hw)),
        compiler_params=pltpu.CompilerParams(
            dimension_semantics=("parallel", "parallel", "parallel"),
            vmem_limit_bytes=int(vmem_budget)),
    )(y3d, shift2d)
    return out3d.reshape(N, C_out, Ho, Wo)


# ----------------------------------------------------------------------------
# Pure-JAX reference
# ----------------------------------------------------------------------------
def _reference(x, weight, gamma, beta, running_mean, running_var, k, s, p, eps=1e-3):
    N, C_in, H, W = x.shape
    C_out = weight.shape[0]
    K = C_in * k * k
    Ho = (H + 2 * p - k) // s + 1
    Wo = (W + 2 * p - k) // s + 1
    xp = jnp.pad(x, ((0, 0), (0, 0), (p, p), (p, p)))
    patches = [xp[:, :, i:i + s * Ho:s, j:j + s * Wo:s]
               for i in range(k) for j in range(k)]
    x3d = jnp.stack(patches, axis=2).reshape(N, K, Ho * Wo).astype(jnp.float32)
    scale = gamma / jnp.sqrt(running_var + eps)
    shift = beta - running_mean * scale
    w2d = weight.reshape(C_out, K).astype(jnp.float32) * scale[:, None]
    y = jnp.einsum("ok,nks->nos", w2d, x3d) + shift[None, :, None]
    return jnp.maximum(y, 0.0).reshape(N, C_out, Ho, Wo)


if __name__ == "__main__":
    # ConvModule(c1=4, c2=8) defaults: k=1, s=1, p=0, g=1, act=True (ReLU), eps=1e-3.
    c1, c2 = 4, 8
    key = jax.random.PRNGKey(0)
    kx, kw, kg, kb, km, kv = jax.random.split(key, 6)

    x = jax.random.normal(kx, (2, c1, 16, 16), dtype=jnp.float32)
    weight = jax.random.normal(kw, (c2, c1, 1, 1), dtype=jnp.float32) * 0.1
    gamma = 1.0 + 0.1 * jax.random.normal(kg, (c2,), dtype=jnp.float32)
    beta = 0.1 * jax.random.normal(kb, (c2,), dtype=jnp.float32)
    running_mean = 0.1 * jax.random.normal(km, (c2,), dtype=jnp.float32)
    running_var = 1.0 + 0.1 * jax.random.uniform(kv, (c2,), dtype=jnp.float32)

    ref = _reference(x, weight, gamma, beta, running_mean, running_var, 1, 1, 0)

    # f32 streams: exact-parity path.
    out_f32 = jax.block_until_ready(conv_module_forward(
        x, weight, gamma, beta, running_mean, running_var,
        k=1, s=1, p=0, stream_dtype=jnp.float32))
    assert out_f32.shape == (2, c2, 16, 16), out_f32.shape
    assert jnp.allclose(out_f32, ref, atol=1e-5, rtol=1e-5), "f32 mismatch vs reference"

    # bf16 streams (default): ~2x less HBM traffic on a memory-bound op.
    out_bf16 = jax.block_until_ready(conv_module_forward(
        x, weight, gamma, beta, running_mean, running_var, k=1, s=1, p=0))
    assert jnp.allclose(out_bf16, ref, atol=3e-2, rtol=3e-2), "bf16 mismatch vs reference"

    # k=3 path: XLA conv + fused Pallas BN-shift+ReLU epilogue.
    weight3 = jax.random.normal(kw, (c2, c1, 3, 3), dtype=jnp.float32) * 0.1
    ref3 = _reference(x, weight3, gamma, beta, running_mean, running_var, 3, 1, 1)
    out3 = jax.block_until_ready(conv_module_forward(
        x, weight3, gamma, beta, running_mean, running_var,
        k=3, s=1, p=1, stream_dtype=jnp.float32))
    assert jnp.allclose(out3, ref3, atol=1e-4, rtol=1e-4), "k=3 mismatch vs reference"

    print("KERNEL_OK")
</pallas_src>

<mosaic_0001>
module attributes {stable_mosaic.version = 11 : i64} {
  func.func @_matmul_bn_relu_kernel(%arg0: i32, %arg1: i32, %arg2: i32, %arg3: i32, %arg4: memref<1x4x256xf32, #tpu.memory_space<vmem>>, %arg5: memref<8x4xf32, #tpu.memory_space<vmem>>, %arg6: memref<8x1xf32, #tpu.memory_space<vmem>>, %arg7: memref<1x8x256xf32, #tpu.memory_space<vmem>>, %arg8: memref<8x256xf32, #tpu.memory_space<vmem>>) attributes {dimension_semantics = [#tpu.dimension_semantics<parallel>, #tpu.dimension_semantics<parallel>, #tpu.dimension_semantics<parallel>, #tpu.dimension_semantics<arbitrary>], iteration_bounds = array<i64: 2, 1, 1, 1>, scalar_prefetch = 0 : i64, scratch_operands = 1 : i64, tpu.core_type = #tpu.core_type<tc>, window_params = [{transform_indices = @transform_0, window_bounds = array<i64: 1, 4, 256>}, {transform_indices = @transform_1, window_bounds = array<i64: 8, 4>}, {transform_indices = @transform_2, window_bounds = array<i64: 8, 1>}, {transform_indices = @transform_3, window_bounds = array<i64: 1, 8, 256>}]} {
    %c0_i32 = arith.constant 0 : i32
    %0 = arith.cmpi eq, %arg3, %c0_i32 : i32
    %1 = arith.extui %0 : i1 to i32
    %c0_i32_0 = arith.constant 0 : i32
    %2 = arith.cmpi ne, %1, %c0_i32_0 : i32
    scf.if %2 {
      %cst_11 = arith.constant 0.000000e+00 : f32
      %13 = vector.broadcast %cst_11 : f32 to vector<8x256xf32>
      %c0_12 = arith.constant 0 : index
      %c0_13 = arith.constant 0 : index
      %14 = vector.load %arg8[%c0_12, %c0_13] : memref<8x256xf32, #tpu.memory_space<vmem>>, vector<8x256xf32>
      tpu.vector_store %arg8[%c0_12, %c0_13], %13 {strides = array<i32>} : memref<8x256xf32, #tpu.memory_space<vmem>>, vector<8x256xf32>,
    } else {
    }
    %c0 = arith.constant 0 : index
    %c0_1 = arith.constant 0 : index
    %3 = vector.load %arg8[%c0, %c0_1] : memref<8x256xf32, #tpu.memory_space<vmem>>, vector<8x256xf32>
    %c0_2 = arith.constant 0 : index
    %c0_3 = arith.constant 0 : index
    %4 = vector.load %arg5[%c0_2, %c0_3] : memref<8x4xf32, #tpu.memory_space<vmem>>, vector<8x4xf32>
    %c0_4 = arith.constant 0 : index
    %c0_5 = arith.constant 0 : index
    %c0_6 = arith.constant 0 : index
    %5 = vector.load %arg4[%c0_4, %c0_5, %c0_6] : memref<1x4x256xf32, #tpu.memory_space<vmem>>, vector<1x4x256xf32>
    %6 = vector.shape_cast %5 : vector<1x4x256xf32> to vector<4x256xf32>
    %cst = arith.constant dense<0.000000e+00> : vector<8x256xf32>
    %7 = tpu.matmul %4, %6, %cst {dimension_numbers = #tpu.dot_dimension_numbers<[1], [0], [0], [1], [0, 0, 1, 1], [], []>} : vector<8x4xf32>, vector<4x256xf32>, vector<8x256xf32> -> vector<8x256xf32>
    %8 = arith.addf %3, %7 : vector<8x256xf32>
    %c0_7 = arith.constant 0 : index
    %c0_8 = arith.constant 0 : index
    %9 = vector.load %arg8[%c0_7, %c0_8] : memref<8x256xf32, #tpu.memory_space<vmem>>, vector<8x256xf32>
    tpu.vector_store %arg8[%c0_7, %c0_8], %8 {strides = array<i32>} : memref<8x256xf32, #tpu.memory_space<vmem>>, vector<8x256xf32>,
    %c0_i32_9 = arith.constant 0 : i32
    %10 = arith.cmpi eq, %arg3, %c0_i32_9 : i32
    %11 = arith.extui %10 : i1 to i32
    %c0_i32_10 = arith.constant 0 : i32
    %12 = arith.cmpi ne, %11, %c0_i32_10 : i32
    scf.if %12 {
      %c0_11 = arith.constant 0 : index
      %c0_12 = arith.constant 0 : index
      %13 = vector.load %arg8[%c0_11, %c0_12] : memref<8x256xf32, #tpu.memory_space<vmem>>, vector<8x256xf32>
      %c0_13 = arith.constant 0 : index
      %c0_14 = arith.constant 0 : index
      %14 = vector.load %arg6[%c0_13, %c0_14] : memref<8x1xf32, #tpu.memory_space<vmem>>, vector<8x1xf32>
      %15 = vector.broadcast %14 : vector<8x1xf32> to vector<8x256xf32>
      %16 = arith.addf %13, %15 : vector<8x256xf32>
      %cst_15 = arith.constant 0.000000e+00 : f32
      %17 = vector.broadcast %cst_15 : f32 to vector<8x256xf32>
      %18 = arith.maximumf %16, %17 : vector<8x256xf32>
      %c0_16 = arith.constant 0 : index
      %c0_17 = arith.constant 0 : index
      %c0_18 = arith.constant 0 : index
      %19 = vector.load %arg7[%c0_16, %c0_17, %c0_18] : memref<1x8x256xf32, #tpu.memory_space<vmem>>, vector<1x8x256xf32>
      %20 = vector.shape_cast %19 : vector<1x8x256xf32> to vector<8x256xf32>
      %21 = vector.shape_cast %18 : vector<8x256xf32> to vector<1x8x256xf32>
      tpu.vector_store %arg7[%c0_16, %c0_17, %c0_18], %21 {strides = array<i32>} : memref<1x8x256xf32, #tpu.memory_space<vmem>>, vector<1x8x256xf32>,
    } else {
    }
    return
  }
  func.func @transform_0(%arg0: i32, %arg1: i32, %arg2: i32, %arg3: i32) -> (i32, i32, i32) {
    %c0_i32 = arith.constant 0 : i32
    return %arg0, %arg3, %arg2 : i32, i32, i32
  }
  func.func @transform_1(%arg0: i32, %arg1: i32, %arg2: i32, %arg3: i32) -> (i32, i32) {
    %c0_i32 = arith.constant 0 : i32
    return %arg1, %arg3 : i32, i32
  }
  func.func @transform_2(%arg0: i32, %arg1: i32, %arg2: i32, %arg3: i32) -> (i32, i32) {
    %c0_i32 = arith.constant 0 : i32
    %c0_i32_0 = arith.constant 0 : i32
    return %arg1, %c0_i32 : i32, i32
  }
  func.func @transform_3(%arg0: i32, %arg1: i32, %arg2: i32, %arg3: i32) -> (i32, i32, i32) {
    %c0_i32 = arith.constant 0 : i32
    return %arg0, %arg1, %arg2 : i32, i32, i32
  }
}

</mosaic_0001>

<llo_original>
// kernel: conv_module_forward.1
$region0: #{conv_module_forward.1}
  #allocation0 [shape = 'u32[]', space=smem, size = 0x4, offset = 0x4, fixed_abs, tag = 'smem constant byte address 0x4 - core index']
  #allocation1 [shape = 'u32[144,128]{1,0:T(1,128)}', space=vmem, size = 0x12000, scoped, tag = 'internal scratch']
  #allocation2 [shape = 'f32[8,256]{1,0:T(8,128)}', space=vmem, size = 0x2000, scoped, tag = 'scratch operand']
  %s0 = inlined_call_operand.vmem [shape: f32[2,4,256], index: 0, kind: input, shape index: {}]
  %s1 = inlined_call_operand.vmem [shape: f32[8,4], index: 1, kind: input, shape index: {}]
  %s2 = inlined_call_operand.vmem [shape: f32[8,1], index: 2, kind: input, shape index: {}]
  %s3 = inlined_call_operand.vmem [shape: f32[2,8,256], index: 3, kind: output, shape index: {}]
  %s4 = sld [smem:[#allocation0]]
  $region53: #{conv_module_forward.1} parent=0
    _
  %s6 = ssub.s32 1, %s4
  %s7 = scalar_select 0, %s6, %s4
  loop: start=0, step=1, limit=4
  $region2: #{conv_module_forward.1} parent=0 // loop_pre_header
    _
  $region3: #{conv_module_forward.1} parent=0 // loop_header
    %s9 = sphi 0, %s13
    %p10 = scmp.ge.s32.totalorder %s9, 4
    %s16 = sphi 0, %s42
    %s17 = sphi 0, %s38
    %s18 = sphi 0, %s34
    %s19 = sphi 0, %s30
    %s20 = sphi 0, %s16
    %s21 = sphi 0, %s17
    %s22 = sphi 0, %s18
    %s23 = sphi 0, %s19
    %s24 = sphi 0, %s20
    %s25 = sphi 0, %s21
    %s26 = sphi 0, %s22
    %s27 = sphi 0, %s23
    %s49 = sphi 0, %s51
    %s52 = sphi 0, %s49
    %s53 = sphi 0, %s52
    %s69 = sphi 0, %s53
    %s77 = sphi 0, %s79
    %s80 = sphi 0, %s77
    %s81 = sphi 0, %s80
    %s97 = sphi 0, %s81
    %s103 = sphi 0, %s105
    %s106 = sphi 0, %s103
    %s107 = sphi 0, %s106
    %s123 = sphi 0, %s107
    %s133 = sphi 0, %s135
    %s136 = sphi 0, %s133
    %s137 = sphi 0, %s136
    %s153 = sphi 0, %s137
  $region4: #{conv_module_forward.1} parent=0 // loop_header_branch
    %12 = sbr.rel (%p10) target = $region8
  $region5: #{conv_module_forward.1} parent=0 // loop_body
    %s14 = ssub.s32 %s9, 1
    %s15 = ssub.s32 %s9, 2
    %s28 = sadd.s32 1, %s19
    %p29 = scmp.ge.s32.totalorder %s28, 1
    %s30 = scalar_select %p29, 0, %s28
    %s31 = sadd.s32 1, %s18
    %s32 = scalar_select %p29, %s31, %s18
    %p33 = scmp.ge.s32.totalorder %s32, 1
    %s34 = scalar_select %p33, 0, %s32
    %s35 = sadd.s32 1, %s17
    %s36 = scalar_select %p33, %s35, %s17
    %p37 = scmp.ge.s32.totalorder %s36, 1
    %s38 = scalar_select %p37, 0, %s36
    %s39 = sadd.s32 1, %s16
    %s40 = scalar_select %p37, %s39, %s16
    %p41 = scmp.ge.s32.totalorder %s40, 2
    %s42 = scalar_select %p41, 0, %s40
    %s43 = ssub.s32 %s16, %s42
    %s44 = ssub.s32 %s19, %s30
    %s45 = sor.u32 %s43, %s44
    %s46 = ssub.s32 %s18, %s34
    %s47 = sor.u32 %s45, %s46
    %p48 = scmp.eq.s32.totalorder %s47, 0
    %s50 = sadd.s32 %s49, 1
    %s51 = scalar_select %p48, %s49, %s50
    %p54 = pneg %p48
    %p55 = scmp.eq.s32.totalorder %s9, 1
    %p56 = por %p54, %p55
    %p57 = scmp.ne.s32.totalorder %s49, %s52
    %p58 = scmp.eq.s32.totalorder %s9, 0
    %p59 = por %p57, %p58
    %p60 = scmp.ne.s32.totalorder %s49, %s52
    %p61 = scmp.eq.s32.totalorder %s14, 1
    %p62 = por %p60, %p61
    %p63 = scmp.ne.s32.totalorder %s52, %s53
    %p64 = scmp.eq.s32.totalorder %s14, 0
    %p65 = por %p63, %p64
    %p66 = scmp.ne.s32.totalorder %s52, %s53
    %p67 = scmp.eq.s32.totalorder %s15, 1
    %p68 = por %p66, %p67
    %p70 = scmp.ne.s32.totalorder %s53, %s69
    %p71 = scmp.eq.s32.totalorder %s15, 0
    %p72 = por %p70, %p71
    %s73 = ssub.s32 %s17, %s38
    %s74 = ssub.s32 %s19, %s30
    %s75 = sor.u32 %s73, %s74
    %p76 = scmp.eq.s32.totalorder %s75, 0
    %s78 = sadd.s32 %s77, 1
    %s79 = scalar_select %p76, %s77, %s78
    %p82 = pneg %p76
    %p83 = scmp.eq.s32.totalorder %s9, 1
    %p84 = por %p82, %p83
    %p85 = scmp.ne.s32.totalorder %s77, %s80
    %p86 = scmp.eq.s32.totalorder %s9, 0
    %p87 = por %p85, %p86
    %p88 = scmp.ne.s32.totalorder %s77, %s80
    %p89 = scmp.eq.s32.totalorder %s14, 1
    %p90 = por %p88, %p89
    %p91 = scmp.ne.s32.totalorder %s80, %s81
    %p92 = scmp.eq.s32.totalorder %s14, 0
    %p93 = por %p91, %p92
    %p94 = scmp.ne.s32.totalorder %s80, %s81
    %p95 = scmp.eq.s32.totalorder %s15, 1
    %p96 = por %p94, %p95
    %p98 = scmp.ne.s32.totalorder %s81, %s97
    %p99 = scmp.eq.s32.totalorder %s15, 0
    %p100 = por %p98, %p99
    %s101 = ssub.s32 %s17, %s38
    %p102 = scmp.eq.s32.totalorder %s101, 0
    %s104 = sadd.s32 %s103, 1
    %s105 = scalar_select %p102, %s103, %s104
    %p108 = pneg %p102
    %p109 = scmp.eq.s32.totalorder %s9, 1
    %p110 = por %p108, %p109
    %p111 = scmp.ne.s32.totalorder %s103, %s106
    %p112 = scmp.eq.s32.totalorder %s9, 0
    %p113 = por %p111, %p112
    %p114 = scmp.ne.s32.totalorder %s103, %s106
    %p115 = scmp.eq.s32.totalorder %s14, 1
    %p116 = por %p114, %p115
    %p117 = scmp.ne.s32.totalorder %s106, %s107
    %p118 = scmp.eq.s32.totalorder %s14, 0
    %p119 = por %p117, %p118
    %p120 = scmp.ne.s32.totalorder %s106, %s107
    %p121 = scmp.eq.s32.totalorder %s15, 1
    %p122 = por %p120, %p121
    %p124 = scmp.ne.s32.totalorder %s107, %s123
    %p125 = scmp.eq.s32.totalorder %s15, 0
    %p126 = por %p124, %p125
    %s127 = ssub.s32 %s16, %s42
    %s128 = ssub.s32 %s17, %s38
    %s129 = sor.u32 %s127, %s128
    %s130 = ssub.s32 %s18, %s34
    %s131 = sor.u32 %s129, %s130
    %p132 = scmp.eq.s32.totalorder %s131, 0
    %s134 = sadd.s32 %s133, 1
    %s135 = scalar_select %p132, %s133, %s134
    %p138 = pneg %p132
    %p139 = scmp.eq.s32.totalorder %s9, 1
    %p140 = por %p138, %p139
    %p141 = scmp.ne.s32.totalorder %s133, %s136
    %p142 = scmp.eq.s32.totalorder %s9, 0
    %p143 = por %p141, %p142
    %p144 = scmp.ne.s32.totalorder %s133, %s136
    %p145 = scmp.eq.s32.totalorder %s14, 1
    %p146 = por %p144, %p145
    %p147 = scmp.ne.s32.totalorder %s136, %s137
    %p148 = scmp.eq.s32.totalorder %s14, 0
    %p149 = por %p147, %p148
    %p150 = scmp.ne.s32.totalorder %s136, %s137
    %p151 = scmp.eq.s32.totalorder %s15, 1
    %p152 = por %p150, %p151
    %p154 = scmp.ne.s32.totalorder %s137, %s153
    %p155 = scmp.eq.s32.totalorder %s15, 0
    %p156 = por %p154, %p155
    %p157 = scmp.le.s32.totalorder 1, %s9
    %p158 = scmp.lt.s32.totalorder %s9, 3
    %p159 = pnand %p157, %p158
    %p160 = pneg %p159
    // Predicated region
    $region9: #{conv_module_forward.1} parent=5 // pred_check
      _
    $region10: #{conv_module_forward.1} parent=5 // pred_check_branch
      %162 = sbr.rel (%p159) target = $region12
    $region11: #{conv_module_forward.1} parent=5 // pred_region
      %s163 = ssub.s32 %s9, 1
      // Predicated region
      $region13: #{conv_module_forward.1} parent=11 // pred_check
        %p164 = pneg %p93
      $region14: #{conv_module_forward.1} parent=11 // pred_check_branch
        %166 = sbr.rel (%p164) target = $region16
      $region15: #{conv_module_forward.1} parent=11 // pred_region
        %p167 = scmp.lt.s32.totalorder %s21, 0
        %s168 = scalar_select %p167, %s21, 0
        %p169 = scmp.lt.s32.totalorder %s23, 0
        %s170 = scalar_select %p169, %s23, 0
        %s171 = sadd.s32 %s170, %s168
        %s172 = smul.addr %s171, 8
        %s173 = scalar_lea.vmem %s1, %s172
      $region16: #{conv_module_forward.1} parent=11 // pred_fallthru
        _
      // Predicated region
      $region17: #{conv_module_forward.1} parent=11 // pred_check
        %p174 = pneg %p119
      $region18: #{conv_module_forward.1} parent=11 // pred_check_branch
        %176 = sbr.rel (%p174) target = $region20
      $region19: #{conv_module_forward.1} parent=11 // pred_region
        %p177 = scmp.lt.s32.totalorder %s21, 0
        %s178 = scalar_select %p177, %s21, 0
        %s179 = smul.addr %s178, 8
        %s180 = scalar_lea.vmem %s2, %s179
      $region20: #{conv_module_forward.1} parent=11 // pred_fallthru
        _
    $region12: #{conv_module_forward.1} parent=5 // pred_fallthru
      _
    %p181 = scmp.lt.s32.totalorder %s9, 2
    // Predicated region
    $region21: #{conv_module_forward.1} parent=5 // pred_check
      %p182 = pneg %p181
    $region22: #{conv_module_forward.1} parent=5 // pred_check_branch
      %184 = sbr.rel (%p182) target = $region24
    $region23: #{conv_module_forward.1} parent=5 // pred_region
      // Predicated region
      $region25: #{conv_module_forward.1} parent=23 // pred_check
        %p185 = pneg %p59
      $region26: #{conv_module_forward.1} parent=23 // pred_check_branch
        %187 = sbr.rel (%p185) target = $region28
      $region27: #{conv_module_forward.1} parent=23 // pred_region
        %s188 = smul.u32 2, %s18
        %p189 = scmp.lt.s32.totalorder %s16, 1
        %s190 = scalar_select %p189, %s16, 1
        %p191 = scmp.lt.s32.totalorder %s19, 0
        %s192 = scalar_select %p191, %s19, 0
        %p193 = scmp.lt.s32.totalorder %s188, 1
        %s194 = scalar_select %p193, %s188, 1
        %s195 = smul.addr %s192, 2
        %s196 = sadd.s32 %s194, %s195
        %s197 = smul.addr %s190, 2
        %s198 = sadd.s32 %s196, %s197
        %s199 = smul.addr %s198, 4
        %s200 = scalar_lea.vmem %s0, %s199
        %s201 = smul.u32 2, %s18
      $region28: #{conv_module_forward.1} parent=23 // pred_fallthru
        _
    $region24: #{conv_module_forward.1} parent=5 // pred_fallthru
      _
    %p202 = scmp.le.s32.totalorder 1, %s9
    %p203 = scmp.lt.s32.totalorder %s9, 3
    %p204 = pnand %p202, %p203
    %p205 = pneg %p204
    // Predicated region
    $region29: #{conv_module_forward.1} parent=5 // pred_check
      _
    $region30: #{conv_module_forward.1} parent=5 // pred_check_branch
      %207 = sbr.rel (%p204) target = $region32
    $region31: #{conv_module_forward.1} parent=5 // pred_region
      %s208 = ssub.s32 %s9, 1
      %s209 = smul.u32 2, %s22
      %p210 = scmp.lt.s32.totalorder %s20, 1
      %s211 = scalar_select %p210, %s20, 1
      %p212 = scmp.lt.s32.totalorder %s23, 0
      %s213 = scalar_select %p212, %s23, 0
      %p214 = scmp.lt.s32.totalorder %s209, 1
      %s215 = scalar_select %p214, %s209, 1
      %s216 = smul.addr %s213, 2
      %s217 = sadd.s32 %s215, %s216
      %s218 = smul.addr %s211, 2
      %s219 = sadd.s32 %s217, %s218
      %s220 = smul.addr %s219, 4
      %s221 = scalar_lea.vmem %s0, %s220
      %p222 = pneg %p65
      %p223 = pneg %p62
      %p224 = scmp.lt.s32.totalorder %s21, 0
      %s225 = scalar_select %p224, %s21, 0
      %p226 = scmp.lt.s32.totalorder %s23, 0
      %s227 = scalar_select %p226, %s23, 0
      %s228 = sadd.s32 %s227, %s225
      %s229 = smul.addr %s228, 8
      %s230 = scalar_lea.vmem %s1, %s229
      %p231 = pneg %p93
      %p232 = pneg %p90
      %p233 = scmp.lt.s32.totalorder %s21, 0
      %s234 = scalar_select %p233, %s21, 0
      %s235 = smul.addr %s234, 8
      %s236 = scalar_lea.vmem %s2, %s235
      %p237 = pneg %p119
      %p238 = pneg %p116
      %p239 = pneg %p149
      %p240 = pneg %p146
      %s241 = smul.u32 2, %s22
      %p242 = scmp.lt.s32.totalorder %s20, 1
      %s243 = scalar_select %p242, %s20, 1
      %p244 = scmp.lt.s32.totalorder %s21, 0
      %s245 = scalar_select %p244, %s21, 0
      %p246 = scmp.lt.s32.totalorder %s241, 1
      %s247 = scalar_select %p246, %s241, 1
      %s248 = smul.addr %s245, 2
      %s249 = sadd.s32 %s247, %s248
      %s250 = smul.addr %s243, 2
      %s251 = sadd.s32 %s249, %s250
      %s252 = smul.addr %s251, 8
      %s253 = scalar_lea.vmem %s3, %s252
      %s254 = smul.u32 2, %s22
      %p255 = scmp.lt.s32.totalorder %s20, 1
      %s256 = scalar_select %p255, %s20, 1
      %p257 = scmp.lt.s32.totalorder %s23, 0
      %s258 = scalar_select %p257, %s23, 0
      %p259 = scmp.lt.s32.totalorder %s254, 1
      %s260 = scalar_select %p259, %s254, 1
      %s261 = smul.addr %s258, 2
      %s262 = sadd.s32 %s260, %s261
      %s263 = smul.addr %s256, 2
      %s264 = sadd.s32 %s262, %s263
      %s265 = smul.addr %s264, 4
      %s266 = scalar_lea.vmem %s0, %s265
      %s267 = smul.u32 2, %s22
      %p268 = scmp.lt.s32.totalorder %s21, 0
      %s269 = scalar_select %p268, %s21, 0
      %p270 = scmp.lt.s32.totalorder %s23, 0
      %s271 = scalar_select %p270, %s23, 0
      %s272 = sadd.s32 %s271, %s269
      %s273 = smul.addr %s272, 8
      %s274 = scalar_lea.vmem %s1, %s273
      %p275 = scmp.lt.s32.totalorder %s21, 0
      %s276 = scalar_select %p275, %s21, 0
      %s277 = smul.addr %s276, 8
      %s278 = scalar_lea.vmem %s2, %s277
      %s279 = smul.u32 2, %s22
      %p280 = scmp.lt.s32.totalorder %s20, 1
      %s281 = scalar_select %p280, %s20, 1
      %p282 = scmp.lt.s32.totalorder %s21, 0
      %s283 = scalar_select %p282, %s21, 0
      %p284 = scmp.lt.s32.totalorder %s279, 1
      %s285 = scalar_select %p284, %s279, 1
      %s286 = smul.addr %s283, 2
      %s287 = sadd.s32 %s285, %s286
      %s288 = smul.addr %s281, 2
      %s289 = sadd.s32 %s287, %s288
      %s290 = smul.addr %s289, 8
      %s291 = scalar_lea.vmem %s3, %s290
      %s292 = smul.u32 2, %s22
      %p293 = scmp.eq.s32.totalorder %s23, 0
      // Predicated region
      $region33: #{conv_module_forward.1} parent=31 // pred_check
        %p294 = pneg %p293
      $region34: #{conv_module_forward.1} parent=31 // pred_check_branch
        %296 = sbr.rel (%p294) target = $region36
      $region35: #{conv_module_forward.1} parent=31 // pred_region
        %297 = vst [vmem:[#allocation2] sm:$0xff] 0.0
        %298 = vst [vmem:[#allocation2 + $0x8] sm:$0xff] 0.0
      $region36: #{conv_module_forward.1} parent=31 // pred_fallthru
        _
      %v299 = vld [vmem:[#allocation2] sm:$0xff]
      %v300 = vld [vmem:[#allocation2 + $0x8] sm:$0xff]
      %v301 = vld [vmem:[%s274] sm:$0xff]
      %v302 = vld [vmem:[%s266] sm:$0xff]
      %v304 = vcombine.high %v302, %v302
      %vm305 = vcmask 31744
      %v307 = vsel %vm305, %v301, 0
      %vm309 = vcmask 1043456
      %v310 = vsel %vm309, %v302, 0
      %v312 = vsel %vm309, %v304, 0
      %314 = vmatprep.subr.mxu0 %v312
      %315 = vmatpush1.msra.mxu0 %v310
      %316 = vmatprep.subr.mxu0 0.0
      %317 = vmatpush1.msra.mxu0 0.0
      %318 = vmatprep.subr.mxu0 0.0
      %319 = vmatpush1.msra.mxu0 0.0
      %320 = vmatprep.subr.mxu0 0.0
      %321 = vmatpush1.msra.mxu0 0.0
      %322 = vmatprep.subr.mxu0 0.0
      %323 = vmatpush1.msra.mxu0 0.0
      %324 = vmatprep.subr.mxu0 0.0
      %325 = vmatpush1.msra.mxu0 0.0
      %326 = vmatprep.subr.mxu0 0.0
      %327 = vmatpush1.msra.mxu0 0.0
      %328 = vmatprep.subr.mxu0 0.0
      %329 = vmatpush1.msra.mxu0 0.0
      %330 = vmatprep.subr.mxu0 0.0
      %331 = vmatpush1.msra.mxu0 0.0
      %332 = vmatprep.subr.mxu0 0.0
      %333 = vmatpush1.msra.mxu0 0.0
      %334 = vmatprep.subr.mxu0 0.0
      %335 = vmatpush1.msra.mxu0 0.0
      %336 = vmatprep.subr.mxu0 0.0
      %337 = vmatpush1.msra.mxu0 0.0
      %338 = vmatprep.subr.mxu0 0.0
      %339 = vmatpush1.msra.mxu0 0.0
      %340 = vmatprep.subr.mxu0 0.0
      %341 = vmatpush1.msra.mxu0 0.0
      %342 = vmatprep.subr.mxu0 0.0
      %343 = vmatpush1.msra.mxu0 0.0
      %344 = vmatprep.subr.mxu0 0.0
      %345 = vmatpush1.msra.mxu0 0.0
      %346 = vmatprep.subr.mxu0 0.0
      %347 = vmatpush1.msra.mxu0 0.0
      %348 = vmatprep.subr.mxu0 0.0
      %349 = vmatpush1.msra.mxu0 0.0
      %350 = vmatprep.subr.mxu0 0.0
      %351 = vmatpush1.msra.mxu0 0.0
      %352 = vmatprep.subr.mxu0 0.0
      %353 = vmatpush1.msra.mxu0 0.0
      %354 = vmatprep.subr.mxu0 0.0
      %355 = vmatpush1.msra.mxu0 0.0
      %356 = vmatprep.subr.mxu0 0.0
      %357 = vmatpush1.msra.mxu0 0.0
      %358 = vmatprep.subr.mxu0 0.0
      %359 = vmatpush1.msra.mxu0 0.0
      %360 = vmatprep.subr.mxu0 0.0
      %361 = vmatpush1.msra.mxu0 0.0
      %362 = vmatprep.subr.mxu0 0.0
      %363 = vmatpush1.msra.mxu0 0.0
      %364 = vmatprep.subr.mxu0 0.0
      %365 = vmatpush1.msra.mxu0 0.0
      %366 = vmatprep.subr.mxu0 0.0
      %367 = vmatpush1.msra.mxu0 0.0
      %368 = vmatprep.subr.mxu0 0.0
      %369 = vmatpush1.msra.mxu0 0.0
      %370 = vmatprep.subr.mxu0 0.0
      %371 = vmatpush1.msra.mxu0 0.0
      %372 = vmatprep.subr.mxu0 0.0
      %373 = vmatpush1.msra.mxu0 0.0
      %374 = vmatprep.subr.mxu0 0.0
      %375 = vmatpush1.msra.mxu0 0.0
      %376 = vmatprep.subr.mxu0 0.0
      %377 = vmatpush1.msra.mxu0 0.0
      %378 = vmatprep.mubr.f32.mxu0 0.0
      %379 = vmatmul.mubr.f32.gmra.mrb[0].mxu0 %v307
      %v380 = vpop.f32.mrb[0].mxu0
      %v381 = vadd.f32 0.0, %v380
      %v382 = vpop.f32.mrb[0].mxu0
      %v383 = vadd.f32 0.0, %v382
      %384 = vdwg.mxu0
      %v385 = vadd.f32 %v299, %v381
      %v386 = vadd.f32 %v300, %v383
      %387 = vst [vmem:[#allocation2] sm:$0xff] %v385
      %388 = vst [vmem:[#allocation2 + $0x8] sm:$0xff] %v386
      // Predicated region
      $region37: #{conv_module_forward.1} parent=31 // pred_check
        %p389 = pneg %p293
      $region38: #{conv_module_forward.1} parent=31 // pred_check_branch
        %391 = sbr.rel (%p389) target = $region40
      $region39: #{conv_module_forward.1} parent=31 // pred_region
        %v392 = vld [vmem:[#allocation2] sm:$0xff]
        %v393 = vld [vmem:[#allocation2 + $0x8] sm:$0xff]
        %v394 = vld [vmem:[%s278] sm:$0xff]
        %396 = vset.pattern.permute.xlu0 0
        %397 = vperm.xlu0 %396, %v394
        %v398 = vpop.permute.xlu0 %397
        %v400 = vadd.f32 %v392, %v398
        %v401 = vadd.f32 %v393, %v398
        %v402 = vmax.f32 %v400, 0.0
        %v403 = vmax.f32 %v401, 0.0
        %404 = vst [vmem:[%s291] sm:$0xff] %v402
        %405 = vst [vmem:[%s291 + $0x8] sm:$0xff] %v403
      $region40: #{conv_module_forward.1} parent=31 // pred_fallthru
        _
      %s406 = smul.u32 2, %s22
      %p407 = scmp.lt.s32.totalorder %s20, 1
      %s408 = scalar_select %p407, %s20, 1
      %p409 = scmp.lt.s32.totalorder %s21, 0
      %s410 = scalar_select %p409, %s21, 0
      %p411 = scmp.lt.s32.totalorder %s406, 1
      %s412 = scalar_select %p411, %s406, 1
      %s413 = smul.addr %s410, 2
      %s414 = sadd.s32 %s412, %s413
      %s415 = smul.addr %s408, 2
      %s416 = sadd.s32 %s414, %s415
      %s417 = smul.addr %s416, 8
      %s418 = scalar_lea.vmem %s3, %s417
      // Predicated region
      $region41: #{conv_module_forward.1} parent=31 // pred_check
        %p419 = pneg %p146
      $region42: #{conv_module_forward.1} parent=31 // pred_check_branch
        %421 = sbr.rel (%p419) target = $region44
      $region43: #{conv_module_forward.1} parent=31 // pred_region
        %s422 = smul.u32 2, %s22
      $region44: #{conv_module_forward.1} parent=31 // pred_fallthru
        _
    $region32: #{conv_module_forward.1} parent=5 // pred_fallthru
      _
    %p423 = scmp.le.s32.totalorder 2, %s9
    // Predicated region
    $region45: #{conv_module_forward.1} parent=5 // pred_check
      %p424 = pneg %p423
    $region46: #{conv_module_forward.1} parent=5 // pred_check_branch
      %426 = sbr.rel (%p424) target = $region48
    $region47: #{conv_module_forward.1} parent=5 // pred_region
      %s427 = ssub.s32 %s9, 2
      // Predicated region
      $region49: #{conv_module_forward.1} parent=47 // pred_check
        %p428 = pneg %p152
      $region50: #{conv_module_forward.1} parent=47 // pred_check_branch
        %430 = sbr.rel (%p428) target = $region52
      $region51: #{conv_module_forward.1} parent=47 // pred_region
        %s431 = smul.u32 2, %s26
        %p432 = scmp.lt.s32.totalorder %s24, 1
        %s433 = scalar_select %p432, %s24, 1
        %p434 = scmp.lt.s32.totalorder %s25, 0
        %s435 = scalar_select %p434, %s25, 0
        %p436 = scmp.lt.s32.totalorder %s431, 1
        %s437 = scalar_select %p436, %s431, 1
        %s438 = smul.addr %s435, 2
        %s439 = sadd.s32 %s437, %s438
        %s440 = smul.addr %s433, 2
        %s441 = sadd.s32 %s439, %s440
        %s442 = smul.addr %s441, 8
        %s443 = scalar_lea.vmem %s3, %s442
      $region52: #{conv_module_forward.1} parent=47 // pred_fallthru
        _
    $region48: #{conv_module_forward.1} parent=5 // pred_fallthru
      _
  $region6: #{conv_module_forward.1} parent=0 // loop_footer
    %s13 = sadd.s32 1, %s9
  $region7: #{conv_module_forward.1} parent=0 // loop_footer_branch
    %8 = sbr.rel target = $region3
  $region8: #{conv_module_forward.1} parent=0 // loop_exit
    _

</llo_original>
